<compile_context>
chip_gen: v5e
topology: v5e:2x2
jax: 0.10.0
libtpu: 0.0.40
codegen_flags: <defaults>
</compile_context>

<pallas_src>
import functools

import jax
import jax.numpy as jnp
from jax.experimental import pallas as pl
from jax.experimental.pallas import tpu as pltpu


_LAYER_ACTS = ("relu", "relu", "none", "relu", "relu", "sigmoid")


def _round_up(n, m):
    return ((n + m - 1) // m) * m


def _cdiv(a, b):
    return -(-a // b)


def _device_kind():
    try:
        return jax.devices()[0].device_kind.lower().replace(" ", "")
    except Exception:
        return ""


def _is_v5e(kind):
    return ("v5e" in kind) or ("v5lite" in kind)


def _has_two_tensorcores(kind):
    # v4 / v5p (megacore) and v7x expose two TensorCores that a "parallel" grid axis can be
    # sharded over; v5e / v6e have a single TC, so splitting there only adds step overhead.
    return any(tag in kind for tag in ("v4", "v5p", "v7"))


# ------------------------------------------------------------------------------ kernel ---

def _autoencoder_kernel(x_ref, w_ref, b_ref, out_ref, *, meta, compute_dtype):
    """Whole 6-layer forward pass fused, one invocation per batch tile.

    w_ref: packed (rows, 128) buffer holding all six (din, dout) weights at static,
           8-aligned row offsets (compute_dtype).
    b_ref: (8, 128) f32 buffer, bias i stored in row i.
    meta:  static tuple of (row_offset, din, dout, activation) per layer.
    """
    h = x_ref[...]                                        # (bt, input_dim) f32
    for idx, (off, din, dout, act) in enumerate(meta):
        w = w_ref[off:off + din, 0:dout]                  # static VMEM slice (zero cost view)
        b = b_ref[idx:idx + 1, 0:dout]                    # (1, dout) f32
        # MXU matmul with narrow operands, f32 accumulation; bias/activation on VPU/EUP in
        # f32 (v5e has no bf16 VPU/EUP path; accuracy preserved everywhere).
        h = jnp.dot(h.astype(compute_dtype), w,
                    preferred_element_type=jnp.float32) + b
        if act == "relu":
            h = jnp.maximum(h, 0.0)                       # f32, VPU
        elif act == "sigmoid":
            h = jax.nn.sigmoid(h)                         # f32, EUP
    out_ref[...] = h.astype(out_ref.dtype)


# --------------------------------------------------------------------- param preparation ---

def pack_params(params, compute_dtype=None):
    """Pack/pre-cast all weights & biases ONCE, outside the jitted forward.

    Returns (wbuf, bbuf, meta, compute_dtype):
      wbuf: (rows, 128) compute_dtype — six (din, dout) weights at 8-aligned row offsets,
            lanes zero-padded (single constant DMA, VMEM-resident across the grid).
      bbuf: (8, 128) f32 — bias i in row i.
      meta: static tuple of (row_offset, din, dout, activation) per layer.
    """
    kind = _device_kind()
    if compute_dtype is None:
        compute_dtype = jnp.float32 if _is_v5e(kind) else jnp.bfloat16

    ws = [params[f"w{i}"] for i in range(1, 7)]
    bs = [params[f"b{i}"] for i in range(1, 7)]
    lane_w = _round_up(max(max(w.shape[1] for w in ws), 128), 128)

    meta = []
    off = 0
    for w, act in zip(ws, _LAYER_ACTS):
        din, dout = w.shape
        meta.append((off, din, dout, act))
        off += _round_up(din, 8)
    rows = _round_up(off, 8)

    wbuf = jnp.zeros((rows, lane_w), dtype=compute_dtype)
    for (o, din, dout, _), w in zip(meta, ws):
        wbuf = wbuf.at[o:o + din, 0:dout].set(w.astype(compute_dtype))

    bbuf = jnp.zeros((_round_up(len(bs), 8), lane_w), dtype=jnp.float32)
    for i, b in enumerate(bs):
        bbuf = bbuf.at[i, 0:b.shape[1]].set(b[0].astype(jnp.float32))

    return wbuf, bbuf, tuple(meta), compute_dtype


# ----------------------------------------------------------------------------- forward ---

@functools.partial(
    jax.jit, static_argnames=("meta", "compute_dtype", "batch_tile", "out_dtype"))
def _forward(x, wbuf, bbuf, *, meta, compute_dtype, batch_tile=2048, out_dtype=None):
    B, input_dim = x.shape
    assert meta[-1][2] == input_dim, "last layer width must equal input_dim"
    out_dtype = x.dtype if out_dtype is None else out_dtype

    kind = _device_kind()
    two_tc = _has_two_tensorcores(kind)

    # --- batch tiling -------------------------------------------------------------------
    align = 8                                   # f32 sublane rule
    assert batch_tile >= align
    padded_B = _round_up(B, align)

    cap = max(align, (batch_tile // align) * align)
    # VMEM clamp: double-buffered x/out tiles + activation headroom must stay well inside
    # v7x's 32 MiB scoped default (64 MiB physical); v5e/v6e (128 MiB) have ample slack.
    bytes_per_row = 4 * input_dim * 4 + 6 * 128 * 4
    vmem_budget = 24 * 1024 * 1024
    cap = min(cap, max(align, (vmem_budget // bytes_per_row) // align * align))

    grid_len = _cdiv(padded_B, min(cap, padded_B))
    if two_tc and padded_B >= 4 * 256:
        # >= 2 grid steps per TensorCore so each core's DMA pipelines behind compute.
        grid_len = max(grid_len, 4)
    bt = _round_up(_cdiv(padded_B, grid_len), align)
    grid_len = _cdiv(padded_B, bt)
    padded_B = bt * grid_len                    # total padding < 8 * grid_len rows (tiny)
    assert bt % align == 0 and padded_B % bt == 0

    if padded_B != B:
        x = jnp.pad(x, ((0, padded_B - B), (0, 0)))

    # --- specs / scheduler hints ----------------------------------------------------------
    in_specs = [
        pl.BlockSpec((bt, input_dim), lambda i: (i, 0)),   # x tile (pipelined per step)
        pl.BlockSpec(wbuf.shape, lambda i: (0, 0)),        # packed weights: 1 DMA, resident
        pl.BlockSpec(bbuf.shape, lambda i: (0, 0)),        # packed biases:  1 DMA, resident
    ]
    out_spec = pl.BlockSpec((bt, input_dim), lambda i: (i, 0))
    out_shape = jax.ShapeDtypeStruct((padded_B, input_dim), out_dtype)

    flops = 2 * padded_B * sum(din * dout for _, din, dout, _ in meta)
    bytes_accessed = (padded_B * input_dim
                      * (x.dtype.itemsize + jnp.dtype(out_dtype).itemsize)
                      + wbuf.size * wbuf.dtype.itemsize
                      + bbuf.size * bbuf.dtype.itemsize)
    cost = pl.CostEstimate(flops=int(flops),
                           transcendentals=int(padded_B * input_dim),   # sigmoid
                           bytes_accessed=int(bytes_accessed))

    cp_kwargs = dict(dimension_semantics=("parallel",))
    vmem_est = (4 * bt * input_dim * 4
                + 2 * (wbuf.size * wbuf.dtype.itemsize + bbuf.size * bbuf.dtype.itemsize)
                + 6 * bt * 128 * 4)
    if vmem_est > 30 * 1024 * 1024:
        hi = (48 if "v7" in kind else 100) * 1024 * 1024
        cp_kwargs["vmem_limit_bytes"] = int(min(max(vmem_est * 5 // 4, 32 * 1024 * 1024), hi))

    out = pl.pallas_call(
        functools.partial(_autoencoder_kernel, meta=meta, compute_dtype=compute_dtype),
        out_shape=out_shape,
        grid=(grid_len,),
        in_specs=in_specs,
        out_specs=out_spec,
        compiler_params=pltpu.CompilerParams(**cp_kwargs),
        cost_estimate=cost,
    )(x, wbuf, bbuf)

    return out[:B]


def autoencoder_forward(x, packed, *, batch_tile=2048, out_dtype=None):
    """x: (B, input_dim) f32; packed = pack_params(params).
    Pass out_dtype=jnp.bfloat16 to halve output store bytes / masked-store count
    (output values are then bf16-rounded)."""
    wbuf, bbuf, meta, compute_dtype = packed
    return _forward(x, wbuf, bbuf, meta=meta, compute_dtype=compute_dtype,
                    batch_tile=batch_tile, out_dtype=out_dtype)


# ------------------------------------------------------------------------------- setup ---

def init_params(key, input_dim, encoding_dim):
    """Deterministic init mirroring the torch module's layer shapes.

    torch.nn.Linear(in, out) has weight (out, in); we store the transpose (in, out) so the
    kernel does x @ W + b directly.
    """
    dims = [
        (input_dim, 128),
        (128, 64),
        (64, encoding_dim),
        (encoding_dim, 64),
        (64, 128),
        (128, input_dim),
    ]
    params = {}
    keys = jax.random.split(key, len(dims))
    for idx, ((din, dout), k) in enumerate(zip(dims, keys), start=1):
        kw, kb = jax.random.split(k)
        bound = 1.0 / jnp.sqrt(float(din))
        params[f"w{idx}"] = jax.random.uniform(
            kw, (din, dout), dtype=jnp.float32, minval=-bound, maxval=bound
        )
        params[f"b{idx}"] = jax.random.uniform(
            kb, (1, dout), dtype=jnp.float32, minval=-bound, maxval=bound
        )
    return params


def _reference_forward(x, params):
    """Plain-JAX f32 reference (matches torch Autoencoder.forward)."""
    h = jax.nn.relu(x @ params["w1"] + params["b1"])
    h = jax.nn.relu(h @ params["w2"] + params["b2"])
    enc = h @ params["w3"] + params["b3"]
    h = jax.nn.relu(enc @ params["w4"] + params["b4"])
    h = jax.nn.relu(h @ params["w5"] + params["b5"])
    return jax.nn.sigmoid(h @ params["w6"] + params["b6"])


if __name__ == "__main__":
    key = jax.random.PRNGKey(0)
    k_params, k_x = jax.random.split(key)

    input_dim = 32
    encoding_dim = 16
    batch = 8

    params = init_params(k_params, input_dim, encoding_dim)
    x = jax.random.uniform(k_x, (batch, input_dim), dtype=jnp.float32)
    ref = _reference_forward(x, params)

    # Exact path (f32 MXU operands) -> tight check against the f32 reference.
    packed_f32 = pack_params(params, compute_dtype=jnp.float32)
    out_f32 = jax.block_until_ready(autoencoder_forward(x, packed_f32))
    assert out_f32.shape == (batch, input_dim)
    assert jnp.allclose(out_f32, ref, atol=1e-5, rtol=1e-5), "f32 mismatch vs reference"

    # Default fast path (bf16 MXU operands on v6e/v7x, f32 on v5e; f32 accumulate) -> loose.
    packed_def = pack_params(params)
    out_def = jax.block_until_ready(autoencoder_forward(x, packed_def))
    assert out_def.shape == (batch, input_dim)
    assert jnp.allclose(out_def, ref, atol=2e-2, rtol=2e-2), "default-path mismatch"

    # Ragged batch (exercises the small alignment pad + output slicing), deterministic key.
    x2 = jax.random.uniform(jax.random.PRNGKey(1), (20, input_dim), dtype=jnp.float32)
    out2 = jax.block_until_ready(autoencoder_forward(x2, packed_f32))
    assert out2.shape == (20, input_dim)
    assert jnp.allclose(out2, _reference_forward(x2, params), atol=1e-5, rtol=1e-5)

    # Multi-tile grid (forces grid_len > 1 via a small batch_tile), exact f32 path.
    x3 = jax.random.uniform(jax.random.PRNGKey(2), (300, input_dim), dtype=jnp.float32)
    out3 = jax.block_until_ready(
        autoencoder_forward(x3, packed_f32, batch_tile=128)
    )
    assert out3.shape == (300, input_dim)
    assert jnp.allclose(out3, _reference_forward(x3, params), atol=1e-5, rtol=1e-5)

    print("KERNEL_OK")
</pallas_src>

<mosaic_0001>
module attributes {stable_mosaic.version = 11 : i64} {
  func.func @_autoencoder_kernel(%arg0: i32, %arg1: memref<8x32xf32, #tpu.memory_space<vmem>>, %arg2: memref<432x128xf32, #tpu.memory_space<vmem>>, %arg3: memref<8x128xf32, #tpu.memory_space<vmem>>, %arg4: memref<8x32xf32, #tpu.memory_space<vmem>>) attributes {dimension_semantics = [#tpu.dimension_semantics<parallel>], iteration_bounds = array<i64: 1>, scalar_prefetch = 0 : i64, scratch_operands = 0 : i64, tpu.core_type = #tpu.core_type<tc>, window_params = [{transform_indices = @transform_0, window_bounds = array<i64: 8, 32>}, {pipeline_mode = #tpu.pipeline_mode<synchronous>, transform_indices = @transform_1, window_bounds = array<i64: 432, 128>}, {pipeline_mode = #tpu.pipeline_mode<synchronous>, transform_indices = @transform_2, window_bounds = array<i64: 8, 128>}, {transform_indices = @transform_3, window_bounds = array<i64: 8, 32>}]} {
    %c0 = arith.constant 0 : index
    %c0_0 = arith.constant 0 : index
    %0 = vector.load %arg1[%c0, %c0_0] : memref<8x32xf32, #tpu.memory_space<vmem>>, vector<8x32xf32>
    %c0_1 = arith.constant 0 : index
    %c0_2 = arith.constant 0 : index
    %1 = vector.load %arg2[%c0_1, %c0_2] : memref<432x128xf32, #tpu.memory_space<vmem>>, vector<32x128xf32>
    %c0_3 = arith.constant 0 : index
    %c0_4 = arith.constant 0 : index
    %2 = vector.load %arg3[%c0_3, %c0_4] : memref<8x128xf32, #tpu.memory_space<vmem>>, vector<1x128xf32>
    %cst = arith.constant dense<0.000000e+00> : vector<8x128xf32>
    %3 = tpu.matmul %0, %1, %cst {dimension_numbers = #tpu.dot_dimension_numbers<[1], [0], [0], [1], [0, 0, 1, 1], [], []>} : vector<8x32xf32>, vector<32x128xf32>, vector<8x128xf32> -> vector<8x128xf32>
    %4 = vector.broadcast %2 : vector<1x128xf32> to vector<8x128xf32>
    %5 = arith.addf %3, %4 : vector<8x128xf32>
    %cst_5 = arith.constant 0.000000e+00 : f32
    %6 = vector.broadcast %cst_5 : f32 to vector<8x128xf32>
    %7 = arith.maximumf %5, %6 : vector<8x128xf32>
    %c32 = arith.constant 32 : index
    %c0_6 = arith.constant 0 : index
    %8 = vector.load %arg2[%c32, %c0_6] : memref<432x128xf32, #tpu.memory_space<vmem>>, vector<128x64xf32>
    %c1 = arith.constant 1 : index
    %c0_7 = arith.constant 0 : index
    %9 = vector.load %arg3[%c1, %c0_7] : memref<8x128xf32, #tpu.memory_space<vmem>>, vector<1x64xf32>
    %cst_8 = arith.constant dense<0.000000e+00> : vector<8x64xf32>
    %10 = tpu.matmul %7, %8, %cst_8 {dimension_numbers = #tpu.dot_dimension_numbers<[1], [0], [0], [1], [0, 0, 1, 1], [], []>} : vector<8x128xf32>, vector<128x64xf32>, vector<8x64xf32> -> vector<8x64xf32>
    %11 = vector.broadcast %9 : vector<1x64xf32> to vector<8x64xf32>
    %12 = arith.addf %10, %11 : vector<8x64xf32>
    %cst_9 = arith.constant 0.000000e+00 : f32
    %13 = vector.broadcast %cst_9 : f32 to vector<8x64xf32>
    %14 = arith.maximumf %12, %13 : vector<8x64xf32>
    %c160 = arith.constant 160 : index
    %c0_10 = arith.constant 0 : index
    %15 = vector.load %arg2[%c160, %c0_10] : memref<432x128xf32, #tpu.memory_space<vmem>>, vector<64x16xf32>
    %c2 = arith.constant 2 : index
    %c0_11 = arith.constant 0 : index
    %16 = vector.load %arg3[%c2, %c0_11] : memref<8x128xf32, #tpu.memory_space<vmem>>, vector<1x16xf32>
    %cst_12 = arith.constant dense<0.000000e+00> : vector<8x16xf32>
    %17 = tpu.matmul %14, %15, %cst_12 {dimension_numbers = #tpu.dot_dimension_numbers<[1], [0], [0], [1], [0, 0, 1, 1], [], []>} : vector<8x64xf32>, vector<64x16xf32>, vector<8x16xf32> -> vector<8x16xf32>
    %18 = vector.broadcast %16 : vector<1x16xf32> to vector<8x16xf32>
    %19 = arith.addf %17, %18 : vector<8x16xf32>
    %c224 = arith.constant 224 : index
    %c0_13 = arith.constant 0 : index
    %20 = vector.load %arg2[%c224, %c0_13] : memref<432x128xf32, #tpu.memory_space<vmem>>, vector<16x64xf32>
    %c3 = arith.constant 3 : index
    %c0_14 = arith.constant 0 : index
    %21 = vector.load %arg3[%c3, %c0_14] : memref<8x128xf32, #tpu.memory_space<vmem>>, vector<1x64xf32>
    %cst_15 = arith.constant dense<0.000000e+00> : vector<8x64xf32>
    %22 = tpu.matmul %19, %20, %cst_15 {dimension_numbers = #tpu.dot_dimension_numbers<[1], [0], [0], [1], [0, 0, 1, 1], [], []>} : vector<8x16xf32>, vector<16x64xf32>, vector<8x64xf32> -> vector<8x64xf32>
    %23 = vector.broadcast %21 : vector<1x64xf32> to vector<8x64xf32>
    %24 = arith.addf %22, %23 : vector<8x64xf32>
    %cst_16 = arith.constant 0.000000e+00 : f32
    %25 = vector.broadcast %cst_16 : f32 to vector<8x64xf32>
    %26 = arith.maximumf %24, %25 : vector<8x64xf32>
    %c240 = arith.constant 240 : index
    %c0_17 = arith.constant 0 : index
    %27 = vector.load %arg2[%c240, %c0_17] : memref<432x128xf32, #tpu.memory_space<vmem>>, vector<64x128xf32>
    %c4 = arith.constant 4 : index
    %c0_18 = arith.constant 0 : index
    %28 = vector.load %arg3[%c4, %c0_18] : memref<8x128xf32, #tpu.memory_space<vmem>>, vector<1x128xf32>
    %cst_19 = arith.constant dense<0.000000e+00> : vector<8x128xf32>
    %29 = tpu.matmul %26, %27, %cst_19 {dimension_numbers = #tpu.dot_dimension_numbers<[1], [0], [0], [1], [0, 0, 1, 1], [], []>} : vector<8x64xf32>, vector<64x128xf32>, vector<8x128xf32> -> vector<8x128xf32>
    %30 = vector.broadcast %28 : vector<1x128xf32> to vector<8x128xf32>
    %31 = arith.addf %29, %30 : vector<8x128xf32>
    %cst_20 = arith.constant 0.000000e+00 : f32
    %32 = vector.broadcast %cst_20 : f32 to vector<8x128xf32>
    %33 = arith.maximumf %31, %32 : vector<8x128xf32>
    %c304 = arith.constant 304 : index
    %c0_21 = arith.constant 0 : index
    %34 = vector.load %arg2[%c304, %c0_21] : memref<432x128xf32, #tpu.memory_space<vmem>>, vector<128x32xf32>
    %c5 = arith.constant 5 : index
    %c0_22 = arith.constant 0 : index
    %35 = vector.load %arg3[%c5, %c0_22] : memref<8x128xf32, #tpu.memory_space<vmem>>, vector<1x32xf32>
    %cst_23 = arith.constant dense<0.000000e+00> : vector<8x32xf32>
    %36 = tpu.matmul %33, %34, %cst_23 {dimension_numbers = #tpu.dot_dimension_numbers<[1], [0], [0], [1], [0, 0, 1, 1], [], []>} : vector<8x128xf32>, vector<128x32xf32>, vector<8x32xf32> -> vector<8x32xf32>
    %37 = vector.broadcast %35 : vector<1x32xf32> to vector<8x32xf32>
    %38 = arith.addf %36, %37 : vector<8x32xf32>
    %39 = arith.negf %38 : vector<8x32xf32>
    %40 = math.exp %39 : vector<8x32xf32>
    %cst_24 = arith.constant 1.000000e+00 : f32
    %41 = vector.broadcast %cst_24 : f32 to vector<8x32xf32>
    %42 = arith.addf %41, %40 : vector<8x32xf32>
    %43 = arith.divf %41, %42 : vector<8x32xf32>
    %c0_25 = arith.constant 0 : index
    %c0_26 = arith.constant 0 : index
    %44 = vector.load %arg4[%c0_25, %c0_26] : memref<8x32xf32, #tpu.memory_space<vmem>>, vector<8x32xf32>
    tpu.vector_store %arg4[%c0_25, %c0_26], %43 {strides = array<i32>} : memref<8x32xf32, #tpu.memory_space<vmem>>, vector<8x32xf32>,
    return
  }
  func.func @transform_0(%arg0: i32) -> (i32, i32) {
    %c0_i32 = arith.constant 0 : i32
    %c0_i32_0 = arith.constant 0 : i32
    return %arg0, %c0_i32 : i32, i32
  }
  func.func @transform_1(%arg0: i32) -> (i32, i32) {
    %c0_i32 = arith.constant 0 : i32
    %c0_i32_0 = arith.constant 0 : i32
    %c0_i32_1 = arith.constant 0 : i32
    return %c0_i32, %c0_i32_0 : i32, i32
  }
  func.func @transform_2(%arg0: i32) -> (i32, i32) {
    %c0_i32 = arith.constant 0 : i32
    %c0_i32_0 = arith.constant 0 : i32
    %c0_i32_1 = arith.constant 0 : i32
    return %c0_i32, %c0_i32_0 : i32, i32
  }
  func.func @transform_3(%arg0: i32) -> (i32, i32) {
    %c0_i32 = arith.constant 0 : i32
    %c0_i32_0 = arith.constant 0 : i32
    return %arg0, %c0_i32 : i32, i32
  }
}

</mosaic_0001>

<llo_original>
// kernel: _forward.1
$region0: #{_forward.1}
  #allocation0 [shape = 'u32[]', space=smem, size = 0x4, offset = 0x4, fixed_abs, tag = 'smem constant byte address 0x4 - core index']
  #allocation1 [shape = 'u32[72,128]{1,0:T(1,128)}', space=vmem, size = 0x9000, scoped, tag = 'internal scratch']
  %s0 = inlined_call_operand.hbm [shape: f32[8,32], index: 0, kind: input, shape index: {}]
  %s1 = inlined_call_operand.hbm [shape: f32[432,128], index: 1, kind: input, shape index: {}]
  %s2 = inlined_call_operand.hbm [shape: f32[8,128], index: 2, kind: input, shape index: {}]
  %s3 = inlined_call_operand.hbm [shape: f32[8,32], index: 3, kind: output, shape index: {}]
  %s4 = sld [smem:[#allocation0]]
  $region34: #{_forward.1} parent=0
    _
  %s6 = ssub.s32 1, %s4
  %s7 = scalar_select 0, %s6, %s4
  $region1: #{_forward.1} parent=0
    #allocation2 [shape = 'u8[4096]{0}', space=vmem, size = 0x1000, scoped, tag = 'input window, operand 0, single buffered']
    #allocation3 [shape = 's32[1]{0}', space=sflag, size = 0x4, scoped, tag = 'scoped memory for _forward.1']
    #allocation4 [shape = 's32[1]{0}', space=sflag, size = 0x4, scoped, tag = 'scoped memory for _forward.1']
    #allocation5 [shape = 'u8[221184]{0}', space=vmem, size = 0x36000, scoped, tag = 'input window, operand 1, single buffered']
    #allocation6 [shape = 's32[1]{0}', space=sflag, size = 0x4, scoped, tag = 'scoped memory for _forward.1']
    #allocation7 [shape = 'u8[4096]{0}', space=vmem, size = 0x1000, scoped, tag = 'input window, operand 2, single buffered']
    #allocation8 [shape = 'u8[4096]{0}', space=vmem, size = 0x1000, scoped, tag = 'output window, operand 0, single buffered']
    %8 = vsyncpa [#allocation3], 0
    %9 = vsyncpa [#allocation6], 0
    %10 = vsyncpa [#allocation4], 0
    // Predicated region
    $region2: #{_forward.1} parent=1 // pred_check
      _
    $region3: #{_forward.1} parent=1 // pred_check_branch
      %12 = sbr.rel (0) target = $region5
    $region4: #{_forward.1} parent=1 // pred_region
      %14 = vsyncadd [#allocation3], 0
      %s16 = sshll.u32 %s0, 4
      %s17 = int_to_ptr.hbm [resolvable:$true] %s16
      %s18 = sshll.u32 [#allocation2], 4
      %s19 = int_to_ptr.vmem [resolvable:$true] %s18
      %21 = dma.hbm_to_vmem [thread:$0]  %s17, 128, %s19, [#allocation3]
    $region5: #{_forward.1} parent=1 // pred_fallthru
      _
    // Predicated region
    $region6: #{_forward.1} parent=1 // pred_check
      _
    $region7: #{_forward.1} parent=1 // pred_check_branch
      %23 = sbr.rel (0) target = $region9
    $region8: #{_forward.1} parent=1 // pred_region
      %25 = vsyncadd [#allocation6], 0
      %s26 = sshll.u32 %s1, 4
      %s27 = int_to_ptr.hbm [resolvable:$true] %s26
      %s28 = sshll.u32 [#allocation5], 4
      %s29 = int_to_ptr.vmem [resolvable:$true] %s28
      %34 = dma.hbm_to_vmem [thread:$0]  %s27, 6912, %s29, [#allocation6], 128, 128, 8
    $region9: #{_forward.1} parent=1 // pred_fallthru
      _
    // Predicated region
    $region10: #{_forward.1} parent=1 // pred_check
      _
    $region11: #{_forward.1} parent=1 // pred_check_branch
      %36 = sbr.rel (0) target = $region13
    $region12: #{_forward.1} parent=1 // pred_region
      %38 = vsyncadd [#allocation6], 0
      %s40 = sshll.u32 %s2, 4
      %s41 = int_to_ptr.hbm [resolvable:$true] %s40
      %s42 = sshll.u32 [#allocation7], 4
      %s43 = int_to_ptr.vmem [resolvable:$true] %s42
      %45 = dma.hbm_to_vmem [thread:$0]  %s41, 128, %s43, [#allocation6]
    $region13: #{_forward.1} parent=1 // pred_fallthru
      _
    // Predicated region
    $region14: #{_forward.1} parent=1 // pred_check
      _
    $region15: #{_forward.1} parent=1 // pred_check_branch
      %47 = sbr.rel (0) target = $region17
    $region16: #{_forward.1} parent=1 // pred_region
      %49 = dma.done [#allocation3], 128
    $region17: #{_forward.1} parent=1 // pred_fallthru
      _
    // Predicated region
    $region18: #{_forward.1} parent=1 // pred_check
      _
    $region19: #{_forward.1} parent=1 // pred_check_branch
      %51 = sbr.rel (0) target = $region21
    $region20: #{_forward.1} parent=1 // pred_region
      %53 = dma.done [#allocation6], 6912
    $region21: #{_forward.1} parent=1 // pred_fallthru
      _
    // Predicated region
    $region22: #{_forward.1} parent=1 // pred_check
      _
    $region23: #{_forward.1} parent=1 // pred_check_branch
      %55 = sbr.rel (0) target = $region25
    $region24: #{_forward.1} parent=1 // pred_region
      %57 = dma.done [#allocation6], 128
    $region25: #{_forward.1} parent=1 // pred_fallthru
      _
    %v58 = vld [vmem:[#allocation2] sm:$0xff]
    %v59 = vld [vmem:[#allocation5] sm:$0xff]
    %v60 = vld [vmem:[#allocation5 + $0x8] sm:$0xff]
    %v61 = vld [vmem:[#allocation5 + $0x10] sm:$0xff]
    %v62 = vld [vmem:[#allocation5 + $0x18] sm:$0xff]
    %v63 = vld [vmem:[#allocation7] sm:$0x1]
    %v64 = vperm.slane %v63, 0
    %vm65 = vcmask 261120
    %v67 = vsel %vm65, %v58, 0
    %69 = vmatpush.msra.mxu0 0.0
    %70 = vmatpush.msra.mxu0 0.0
    %71 = vmatpush.msra.mxu0 0.0
    %72 = vmatpush.msra.mxu0 0.0
    %73 = vmatpush.msra.mxu0 0.0
    %74 = vmatpush.msra.mxu0 0.0
    %75 = vmatpush.msra.mxu0 0.0
    %76 = vmatpush.msra.mxu0 0.0
    %77 = vmatpush.msra.mxu0 0.0
    %78 = vmatpush.msra.mxu0 0.0
    %79 = vmatpush.msra.mxu0 0.0
    %80 = vmatpush.msra.mxu0 0.0
    %81 = vmatpush.msra.mxu0 %v62
    %82 = vmatpush.msra.mxu0 %v61
    %83 = vmatpush.msra.mxu0 %v60
    %84 = vmatpush.msra.mxu0 %v59
    %85 = vmatmul.f32.gmra.mxu0 %v67
    %v86 = vpop.f32.mrf.mxu0
    %v87 = vadd.f32 %v64, %v86
    %88 = vdwg.mxu0
    %v89 = vmax.f32 %v87, 0.0
    %v90 = vld [vmem:[#allocation5 + $0x20] sm:$0xff]
    %v91 = vld [vmem:[#allocation5 + $0x28] sm:$0xff]
    %v92 = vld [vmem:[#allocation5 + $0x30] sm:$0xff]
    %v93 = vld [vmem:[#allocation5 + $0x38] sm:$0xff]
    %v94 = vld [vmem:[#allocation5 + $0x40] sm:$0xff]
    %v95 = vld [vmem:[#allocation5 + $0x48] sm:$0xff]
    %v96 = vld [vmem:[#allocation5 + $0x50] sm:$0xff]
    %v97 = vld [vmem:[#allocation5 + $0x58] sm:$0xff]
    %v98 = vld [vmem:[#allocation5 + $0x60] sm:$0xff]
    %v99 = vld [vmem:[#allocation5 + $0x68] sm:$0xff]
    %v100 = vld [vmem:[#allocation5 + $0x70] sm:$0xff]
    %v101 = vld [vmem:[#allocation5 + $0x78] sm:$0xff]
    %v102 = vld [vmem:[#allocation5 + $0x80] sm:$0xff]
    %v103 = vld [vmem:[#allocation5 + $0x88] sm:$0xff]
    %v104 = vld [vmem:[#allocation5 + $0x90] sm:$0xff]
    %v105 = vld [vmem:[#allocation5 + $0x98] sm:$0xff]
    %v106 = vld [vmem:[#allocation7 + $0x1] sm:$0x1]
    %v107 = vperm.slane %v106, 0
    %108 = vmatpush.msra.mxu0 %v105
    %109 = vmatpush.msra.mxu0 %v104
    %110 = vmatpush.msra.mxu0 %v103
    %111 = vmatpush.msra.mxu0 %v102
    %112 = vmatpush.msra.mxu0 %v101
    %113 = vmatpush.msra.mxu0 %v100
    %114 = vmatpush.msra.mxu0 %v99
    %115 = vmatpush.msra.mxu0 %v98
    %116 = vmatpush.msra.mxu0 %v97
    %117 = vmatpush.msra.mxu0 %v96
    %118 = vmatpush.msra.mxu0 %v95
    %119 = vmatpush.msra.mxu0 %v94
    %120 = vmatpush.msra.mxu0 %v93
    %121 = vmatpush.msra.mxu0 %v92
    %122 = vmatpush.msra.mxu0 %v91
    %123 = vmatpush.msra.mxu0 %v90
    %124 = vmatmul.f32.gmra.mxu0 %v89
    %v125 = vpop.f32.mrf.mxu0
    %v126 = vadd.f32 %v107, %v125
    %127 = vdwg.mxu0
    %v128 = vmax.f32 %v126, 0.0
    %v129 = vld [vmem:[#allocation5 + $0xa0] sm:$0xff]
    %v130 = vld [vmem:[#allocation5 + $0xa8] sm:$0xff]
    %v131 = vld [vmem:[#allocation5 + $0xb0] sm:$0xff]
    %v132 = vld [vmem:[#allocation5 + $0xb8] sm:$0xff]
    %v133 = vld [vmem:[#allocation5 + $0xc0] sm:$0xff]
    %v134 = vld [vmem:[#allocation5 + $0xc8] sm:$0xff]
    %v135 = vld [vmem:[#allocation5 + $0xd0] sm:$0xff]
    %v136 = vld [vmem:[#allocation5 + $0xd8] sm:$0xff]
    %v137 = vld [vmem:[#allocation7 + $0x2] sm:$0x1]
    %v138 = vperm.slane %v137, 0
    %vm139 = vcmask 523264
    %v141 = vsel %vm139, %v128, 0
    %143 = vmatpush.msra.mxu0 0.0
    %144 = vmatpush.msra.mxu0 0.0
    %145 = vmatpush.msra.mxu0 0.0
    %146 = vmatpush.msra.mxu0 0.0
    %147 = vmatpush.msra.mxu0 0.0
    %148 = vmatpush.msra.mxu0 0.0
    %149 = vmatpush.msra.mxu0 0.0
    %150 = vmatpush.msra.mxu0 0.0
    %151 = vmatpush.msra.mxu0 %v136
    %152 = vmatpush.msra.mxu0 %v135
    %153 = vmatpush.msra.mxu0 %v134
    %154 = vmatpush.msra.mxu0 %v133
    %155 = vmatpush.msra.mxu0 %v132
    %156 = vmatpush.msra.mxu0 %v131
    %157 = vmatpush.msra.mxu0 %v130
    %158 = vmatpush.msra.mxu0 %v129
    %159 = vmatmul.f32.gmra.mxu0 %v141
    %v160 = vpop.f32.mrf.mxu0
    %v161 = vadd.f32 %v138, %v160
    %162 = vdwg.mxu0
    %v163 = vld [vmem:[#allocation5 + $0xe0] sm:$0xff]
    %v164 = vld [vmem:[#allocation5 + $0xe8] sm:$0xff]
    %v165 = vld [vmem:[#allocation7 + $0x3] sm:$0x1]
    %v166 = vperm.slane %v165, 0
    %vm167 = vcmask 130048
    %v169 = vsel %vm167, %v161, 0
    %171 = vmatpush.msra.mxu0 0.0
    %172 = vmatpush.msra.mxu0 0.0
    %173 = vmatpush.msra.mxu0 0.0
    %174 = vmatpush.msra.mxu0 0.0
    %175 = vmatpush.msra.mxu0 0.0
    %176 = vmatpush.msra.mxu0 0.0
    %177 = vmatpush.msra.mxu0 0.0
    %178 = vmatpush.msra.mxu0 0.0
    %179 = vmatpush.msra.mxu0 0.0
    %180 = vmatpush.msra.mxu0 0.0
    %181 = vmatpush.msra.mxu0 0.0
    %182 = vmatpush.msra.mxu0 0.0
    %183 = vmatpush.msra.mxu0 0.0
    %184 = vmatpush.msra.mxu0 0.0
    %185 = vmatpush.msra.mxu0 %v164
    %186 = vmatpush.msra.mxu0 %v163
    %187 = vmatmul.f32.gmra.mxu0 %v169
    %v188 = vpop.f32.mrf.mxu0
    %v189 = vadd.f32 %v166, %v188
    %190 = vdwg.mxu0
    %v191 = vmax.f32 %v189, 0.0
    %v192 = vld [vmem:[#allocation5 + $0xf0] sm:$0xff]
    %v193 = vld [vmem:[#allocation5 + $0xf8] sm:$0xff]
    %v194 = vld [vmem:[#allocation5 + $0x100] sm:$0xff]
    %v195 = vld [vmem:[#allocation5 + $0x108] sm:$0xff]
    %v196 = vld [vmem:[#allocation5 + $0x110] sm:$0xff]
    %v197 = vld [vmem:[#allocation5 + $0x118] sm:$0xff]
    %v198 = vld [vmem:[#allocation5 + $0x120] sm:$0xff]
    %v199 = vld [vmem:[#allocation5 + $0x128] sm:$0xff]
    %v200 = vld [vmem:[#allocation7 + $0x4] sm:$0x1]
    %v201 = vperm.slane %v200, 0
    %v203 = vsel %vm139, %v191, 0
    %205 = vmatpush.msra.mxu0 0.0
    %206 = vmatpush.msra.mxu0 0.0
    %207 = vmatpush.msra.mxu0 0.0
    %208 = vmatpush.msra.mxu0 0.0
    %209 = vmatpush.msra.mxu0 0.0
    %210 = vmatpush.msra.mxu0 0.0
    %211 = vmatpush.msra.mxu0 0.0
    %212 = vmatpush.msra.mxu0 0.0
    %213 = vmatpush.msra.mxu0 %v199
    %214 = vmatpush.msra.mxu0 %v198
    %215 = vmatpush.msra.mxu0 %v197
    %216 = vmatpush.msra.mxu0 %v196
    %217 = vmatpush.msra.mxu0 %v195
    %218 = vmatpush.msra.mxu0 %v194
    %219 = vmatpush.msra.mxu0 %v193
    %220 = vmatpush.msra.mxu0 %v192
    %221 = vmatmul.f32.gmra.mxu0 %v203
    %v222 = vpop.f32.mrf.mxu0
    %v223 = vadd.f32 %v201, %v222
    %224 = vdwg.mxu0
    %v225 = vmax.f32 %v223, 0.0
    %v226 = vld [vmem:[#allocation5 + $0x130] sm:$0xff]
    %v227 = vld [vmem:[#allocation5 + $0x138] sm:$0xff]
    %v228 = vld [vmem:[#allocation5 + $0x140] sm:$0xff]
    %v229 = vld [vmem:[#allocation5 + $0x148] sm:$0xff]
    %v230 = vld [vmem:[#allocation5 + $0x150] sm:$0xff]
    %v231 = vld [vmem:[#allocation5 + $0x158] sm:$0xff]
    %v232 = vld [vmem:[#allocation5 + $0x160] sm:$0xff]
    %v233 = vld [vmem:[#allocation5 + $0x168] sm:$0xff]
    %v234 = vld [vmem:[#allocation5 + $0x170] sm:$0xff]
    %v235 = vld [vmem:[#allocation5 + $0x178] sm:$0xff]
    %v236 = vld [vmem:[#allocation5 + $0x180] sm:$0xff]
    %v237 = vld [vmem:[#allocation5 + $0x188] sm:$0xff]
    %v238 = vld [vmem:[#allocation5 + $0x190] sm:$0xff]
    %v239 = vld [vmem:[#allocation5 + $0x198] sm:$0xff]
    %v240 = vld [vmem:[#allocation5 + $0x1a0] sm:$0xff]
    %v241 = vld [vmem:[#allocation5 + $0x1a8] sm:$0xff]
    %v242 = vld [vmem:[#allocation7 + $0x5] sm:$0x1]
    %v243 = vperm.slane %v242, 0
    %244 = vmatpush.msra.mxu0 %v241
    %245 = vmatpush.msra.mxu0 %v240
    %246 = vmatpush.msra.mxu0 %v239
    %247 = vmatpush.msra.mxu0 %v238
    %248 = vmatpush.msra.mxu0 %v237
    %249 = vmatpush.msra.mxu0 %v236
    %250 = vmatpush.msra.mxu0 %v235
    %251 = vmatpush.msra.mxu0 %v234
    %252 = vmatpush.msra.mxu0 %v233
    %253 = vmatpush.msra.mxu0 %v232
    %254 = vmatpush.msra.mxu0 %v231
    %255 = vmatpush.msra.mxu0 %v230
    %256 = vmatpush.msra.mxu0 %v229
    %257 = vmatpush.msra.mxu0 %v228
    %258 = vmatpush.msra.mxu0 %v227
    %259 = vmatpush.msra.mxu0 %v226
    %260 = vmatmul.f32.gmra.mxu0 %v225
    %v261 = vpop.f32.mrf.mxu0
    %v262 = vadd.f32 %v243, %v261
    %263 = vdwg.mxu0
    %v264 = vxor.u32 %v262, 2147483648
    %v265 = vmul.f32 %v264, 1.442695
    %v266 = vpow.pop %v265
    %v267 = vadd.f32 %v266, 1.0
    %v268 = vrcp.pop %v267
    %v269 = vmul.f32 %v267, %v268
    %v270 = vsub.f32 1.0, %v269
    %v271 = vmul.f32 %v268, %v270
    %v272 = vadd.f32 %v268, %v271
    %vm273 = vweird.f32 %v267
    %vm274 = vweird.f32 %v268
    %vm275 = vmor %vm273, %vm274
    %v276 = vsel %vm275, %v268, %v272
    %v277 = vand.u32 2147483647, %v267
    %vm278 = vcmp.eq.f32.partialorder %v277, 8.507059e+37
    %v279 = vand.u32 %v267, 2147483648
    %v280 = vor.u32 1.1754944e-38, %v279
    %v281 = vsel %vm278, %v280, %v276
    %v282 = vmul.f32 1.0, %v281
    %283 = vst.msk [vmem:[#allocation8] sm:$0xff] %vm65, %v282
    // Predicated region
    $region26: #{_forward.1} parent=1 // pred_check
      _
    $region27: #{_forward.1} parent=1 // pred_check_branch
      %285 = sbr.rel (0) target = $region29
    $region28: #{_forward.1} parent=1 // pred_region
      %287 = vsyncadd [#allocation4], 0
      %s289 = sshll.u32 [#allocation8], 4
      %s290 = int_to_ptr.vmem [resolvable:$true] %s289
      %s291 = sshll.u32 %s3, 4
      %s292 = int_to_ptr.hbm [resolvable:$true] %s291
      %294 = dma.vmem_to_hbm [thread:$0]  %s290, 128, %s292, [#allocation4]
    $region29: #{_forward.1} parent=1 // pred_fallthru
      _
    // Predicated region
    $region30: #{_forward.1} parent=1 // pred_check
      _
    $region31: #{_forward.1} parent=1 // pred_check_branch
      %296 = sbr.rel (0) target = $region33
    $region32: #{_forward.1} parent=1 // pred_region
      %298 = dma.done [#allocation4], 128
    $region33: #{_forward.1} parent=1 // pred_fallthru
      _
    %299 = vsyncpa [#allocation3], 1
    %300 = vsyncpa [#allocation6], 1
    %301 = vsyncpa [#allocation4], 1

</llo_original>
